<compile_context>
chip_gen: v5e
topology: v5e:2x2
jax: 0.10.0
libtpu: 0.0.40
codegen_flags: <defaults>
</compile_context>

<pallas_src>
import jax
import jax.numpy as jnp
from jax.experimental import pallas as pl
from jax.experimental.pallas import tpu as pltpu

LANE = 128
SUBLANE = 8


def _round_up(n, m):
    return (n + m - 1) // m * m


def chess_ai_kernel(x_ref, w0_ref, b0_ref, w1_ref, b1_ref, w2_ref, b2_ref,
                    o_ref, xpad_ref):
    """Fused MLP forward: (Linear+ReLU) x2 -> Linear -> sigmoid.

    x_ref    : (R, 65)    streamed activation tile (native lane width)
    w0_ref   : (128, 256) lane-padded layer-0 weight (compute dtype), resident
    b0_ref   : (1, 256)   f32 bias
    w1_ref   : (256, 128) lane-padded layer-1 weight, resident
    b1_ref   : (1, 128)   f32 bias
    w2_ref   : (1, 128)   transposed / lane-padded output weight row
    b2_ref   : (1, 1)     f32 output bias
    o_ref    : (R, 1)     narrow sigmoid output (only the live lane is stored)
    xpad_ref : (R, 128)   VMEM scratch holding the lane-padded x tile
    """
    cdt = w0_ref.dtype
    in_f = x_ref.shape[1]

    # Zero-pad x lanes 65 -> 128 entirely in VMEM (no padded copy of x in HBM).
    xpad_ref[...] = jnp.zeros_like(xpad_ref)
    xpad_ref[:, :in_f] = x_ref[...].astype(cdt)

    # Layer 0: Linear + ReLU (f32 MXU accumulation; pad lanes contribute 0).
    h0 = jnp.dot(xpad_ref[...], w0_ref[...],
                 preferred_element_type=jnp.float32) + b0_ref[...]
    h0 = jnp.maximum(h0, 0.0)

    # Layer 1: Linear + ReLU.
    h1 = jnp.dot(h0.astype(cdt), w1_ref[...],
                 preferred_element_type=jnp.float32) + b1_ref[...]
    h1 = jnp.maximum(h1, 0.0)

    # Output layer (128 -> 1): VPU multiply + lane reduction (w2 is 127/128 zero
    # columns, no point pushing it through the MXU), then sigmoid (EUP).
    w2 = w2_ref[...].astype(jnp.float32)                       # (1, 128)
    z = jnp.sum(h1 * w2, axis=-1, keepdims=True) + b2_ref[...]  # (R, 1)
    o_ref[...] = jax.nn.sigmoid(z)                               # narrow store


def init_params(key, input_size=65, hidden_layer_sizes=(130, 65), output_size=1):
    """PyTorch nn.Linear-style init; weights stored (in_features, out_features)."""
    sizes = [input_size, *hidden_layer_sizes, output_size]
    params = {}
    for i, (fan_in, fan_out) in enumerate(zip(sizes[:-1], sizes[1:])):
        key, kw, kb = jax.random.split(key, 3)
        bound = 1.0 / jnp.sqrt(float(fan_in))
        params[f"w{i}"] = jax.random.uniform(
            kw, (fan_in, fan_out), jnp.float32, minval=-bound, maxval=bound)
        params[f"b{i}"] = jax.random.uniform(
            kb, (1, fan_out), jnp.float32, minval=-bound, maxval=bound)
    return params


def pad_params(params, compute_dtype=jnp.bfloat16):
    """Zero-pad the Linear weights to lane-aligned widths once, outside the
    kernel.  Weights are cast to `compute_dtype`; biases stay f32 (added to f32
    accumulators).  The output layer is stored as a transposed (1, 128) row."""
    def pad2(a, rows, cols, dtype):
        out = jnp.zeros((rows, cols), dtype)
        return out.at[:a.shape[0], :a.shape[1]].set(a.astype(dtype))

    d_in, h0 = params["w0"].shape
    _, h1 = params["w1"].shape
    _, d_out = params["w2"].shape
    assert d_out == 1, "kernel specializes the ChessAI output_size=1 head"
    in_p, h0_p, h1_p = (_round_up(d, LANE) for d in (d_in, h0, h1))

    return {
        "w0": pad2(params["w0"], in_p, h0_p, compute_dtype),
        "b0": pad2(params["b0"], 1, h0_p, jnp.float32),
        "w1": pad2(params["w1"], h0_p, h1_p, compute_dtype),
        "b1": pad2(params["b1"], 1, h1_p, jnp.float32),
        "w2t": pad2(params["w2"].T, 1, h1_p, compute_dtype),
        "b2": params["b2"].astype(jnp.float32).reshape(1, 1),
        "in_features": d_in,
        "in_padded": in_p,
        "compute_dtype": compute_dtype,
    }


def chess_ai_forward(x, padded, *, block_rows=2048,
                     vmem_limit_bytes=32 * 1024 * 1024):
    """x: (batch, in_features).  `padded`: output of pad_params()."""
    batch, in_features = x.shape
    assert in_features == padded["in_features"]
    cdt = padded["compute_dtype"]
    w0, b0, w1, b1, w2t, b2 = (padded[k]
                               for k in ("w0", "b0", "w1", "b1", "w2t", "b2"))
    in_pad = padded["in_padded"]

    # Pad the batch only to the sublane multiple (no lane padding of x in HBM).
    rows = _round_up(batch, SUBLANE)
    if rows != batch:
        x = jnp.pad(x, ((0, rows - batch), (0, 0)))

    # Tile the batch; keep >= 2 grid steps when the batch allows it so the
    # "parallel" axis can be sharded across both v7x TensorCores.  Trailing
    # partial blocks are masked by Pallas (grid uses cdiv).
    block_rows = max(SUBLANE, min(_round_up(block_rows, SUBLANE), rows))
    if rows >= 2 * SUBLANE and pl.cdiv(rows, block_rows) < 2:
        block_rows = _round_up(pl.cdiv(rows, 2), SUBLANE)
    grid = (pl.cdiv(rows, block_rows),)

    # Constant index_map -> weights/biases stay VMEM-resident across grid steps.
    resident = lambda a: pl.BlockSpec(a.shape, lambda i: (0, 0))

    out = pl.pallas_call(
        chess_ai_kernel,
        out_shape=jax.ShapeDtypeStruct((rows, 1), jnp.float32),
        grid=grid,
        in_specs=[
            pl.BlockSpec((block_rows, in_features), lambda i: (i, 0)),  # x tiles
            resident(w0), resident(b0),
            resident(w1), resident(b1),
            resident(w2t), resident(b2),
        ],
        out_specs=pl.BlockSpec((block_rows, 1), lambda i: (i, 0)),  # narrow out
        scratch_shapes=[pltpu.VMEM((block_rows, in_pad), cdt)],
        compiler_params=pltpu.CompilerParams(
            dimension_semantics=("parallel",),
            vmem_limit_bytes=vmem_limit_bytes,
        ),
    )(x, w0, b0, w1, b1, w2t, b2)

    return out[:batch]  # drop sublane batch padding (if any)


def reference_forward(x, params):
    h = jnp.maximum(x @ params["w0"] + params["b0"], 0.0)
    h = jnp.maximum(h @ params["w1"] + params["b1"], 0.0)
    return jax.nn.sigmoid(h @ params["w2"] + params["b2"])


if __name__ == "__main__":
    key = jax.random.PRNGKey(0)
    key, kx, kx2 = jax.random.split(key, 3)

    input_size = 65
    params = init_params(key, input_size=input_size,
                         hidden_layer_sizes=(130, 65), output_size=1)

    # Small demo batch (multiple of the sublane).
    x = jax.random.normal(kx, (8, input_size), jnp.float32)
    ref = reference_forward(x, params)

    padded_f32 = pad_params(params, jnp.float32)
    out = jax.block_until_ready(chess_ai_forward(x, padded_f32))
    assert out.shape == (8, 1), out.shape
    assert jnp.allclose(out, ref, atol=1e-4, rtol=1e-4), "f32 mismatch vs reference"

    # Ragged batch: exercises sublane padding + a partial trailing grid block.
    x2 = jax.random.normal(kx2, (20, input_size), jnp.float32)
    ref2 = reference_forward(x2, params)
    out2 = jax.block_until_ready(chess_ai_forward(x2, padded_f32))
    assert out2.shape == (20, 1), out2.shape
    assert jnp.allclose(out2, ref2, atol=1e-4, rtol=1e-4), "ragged-batch mismatch"

    # bf16 streamed-weight path (f32 accumulation, f32 biases) — the recommended
    # large-batch configuration on v6e / v7x; looser tolerance from bf16 rounding.
    padded_bf16 = pad_params(params, jnp.bfloat16)
    out_bf16 = jax.block_until_ready(chess_ai_forward(x, padded_bf16))
    assert out_bf16.shape == (8, 1), out_bf16.shape
    assert jnp.allclose(out_bf16, ref, atol=5e-2), "bf16 mismatch vs reference"

    print("KERNEL_OK")
</pallas_src>

<mosaic_0001>
module attributes {stable_mosaic.version = 11 : i64} {
  func.func @chess_ai_kernel(%arg0: i32, %arg1: memref<8x65xf32, #tpu.memory_space<vmem>>, %arg2: memref<128x256xf32, #tpu.memory_space<vmem>>, %arg3: memref<1x256xf32, #tpu.memory_space<vmem>>, %arg4: memref<256x128xf32, #tpu.memory_space<vmem>>, %arg5: memref<1x128xf32, #tpu.memory_space<vmem>>, %arg6: memref<1x128xf32, #tpu.memory_space<vmem>>, %arg7: memref<1x1xf32, #tpu.memory_space<vmem>>, %arg8: memref<8x1xf32, #tpu.memory_space<vmem>>, %arg9: memref<8x128xf32, #tpu.memory_space<vmem>>) attributes {dimension_semantics = [#tpu.dimension_semantics<parallel>], iteration_bounds = array<i64: 1>, scalar_prefetch = 0 : i64, scratch_operands = 1 : i64, tpu.core_type = #tpu.core_type<tc>, window_params = [{transform_indices = @transform_0, window_bounds = array<i64: 8, 65>}, {pipeline_mode = #tpu.pipeline_mode<synchronous>, transform_indices = @transform_1, window_bounds = array<i64: 128, 256>}, {pipeline_mode = #tpu.pipeline_mode<synchronous>, transform_indices = @transform_2, window_bounds = array<i64: 1, 256>}, {pipeline_mode = #tpu.pipeline_mode<synchronous>, transform_indices = @transform_3, window_bounds = array<i64: 256, 128>}, {pipeline_mode = #tpu.pipeline_mode<synchronous>, transform_indices = @transform_4, window_bounds = array<i64: 1, 128>}, {pipeline_mode = #tpu.pipeline_mode<synchronous>, transform_indices = @transform_5, window_bounds = array<i64: 1, 128>}, {pipeline_mode = #tpu.pipeline_mode<synchronous>, transform_indices = @transform_6, window_bounds = array<i64: 1, 1>}, {transform_indices = @transform_7, window_bounds = array<i64: 8, 1>}]} {
    %cst = arith.constant 0.000000e+00 : f32
    %0 = vector.broadcast %cst : f32 to vector<8x128xf32>
    %c0 = arith.constant 0 : index
    %c0_0 = arith.constant 0 : index
    %1 = vector.load %arg9[%c0, %c0_0] : memref<8x128xf32, #tpu.memory_space<vmem>>, vector<8x128xf32>
    tpu.vector_store %arg9[%c0, %c0_0], %0 {strides = array<i32>} : memref<8x128xf32, #tpu.memory_space<vmem>>, vector<8x128xf32>,
    %c0_1 = arith.constant 0 : index
    %c0_2 = arith.constant 0 : index
    %2 = vector.load %arg1[%c0_1, %c0_2] : memref<8x65xf32, #tpu.memory_space<vmem>>, vector<8x65xf32>
    %c0_3 = arith.constant 0 : index
    %c0_4 = arith.constant 0 : index
    %3 = vector.load %arg9[%c0_3, %c0_4] : memref<8x128xf32, #tpu.memory_space<vmem>>, vector<8x65xf32>
    tpu.vector_store %arg9[%c0_3, %c0_4], %2 {strides = array<i32>} : memref<8x128xf32, #tpu.memory_space<vmem>>, vector<8x65xf32>,
    %c0_5 = arith.constant 0 : index
    %c0_6 = arith.constant 0 : index
    %4 = vector.load %arg9[%c0_5, %c0_6] : memref<8x128xf32, #tpu.memory_space<vmem>>, vector<8x128xf32>
    %c0_7 = arith.constant 0 : index
    %c0_8 = arith.constant 0 : index
    %5 = vector.load %arg2[%c0_7, %c0_8] : memref<128x256xf32, #tpu.memory_space<vmem>>, vector<128x256xf32>
    %cst_9 = arith.constant dense<0.000000e+00> : vector<8x256xf32>
    %6 = tpu.matmul %4, %5, %cst_9 {dimension_numbers = #tpu.dot_dimension_numbers<[1], [0], [0], [1], [0, 0, 1, 1], [], []>} : vector<8x128xf32>, vector<128x256xf32>, vector<8x256xf32> -> vector<8x256xf32>
    %c0_10 = arith.constant 0 : index
    %c0_11 = arith.constant 0 : index
    %7 = vector.load %arg3[%c0_10, %c0_11] : memref<1x256xf32, #tpu.memory_space<vmem>>, vector<1x256xf32>
    %8 = vector.broadcast %7 : vector<1x256xf32> to vector<8x256xf32>
    %9 = arith.addf %6, %8 : vector<8x256xf32>
    %cst_12 = arith.constant 0.000000e+00 : f32
    %10 = vector.broadcast %cst_12 : f32 to vector<8x256xf32>
    %11 = arith.maximumf %9, %10 : vector<8x256xf32>
    %c0_13 = arith.constant 0 : index
    %c0_14 = arith.constant 0 : index
    %12 = vector.load %arg4[%c0_13, %c0_14] : memref<256x128xf32, #tpu.memory_space<vmem>>, vector<256x128xf32>
    %cst_15 = arith.constant dense<0.000000e+00> : vector<8x128xf32>
    %13 = tpu.matmul %11, %12, %cst_15 {dimension_numbers = #tpu.dot_dimension_numbers<[1], [0], [0], [1], [0, 0, 1, 1], [], []>} : vector<8x256xf32>, vector<256x128xf32>, vector<8x128xf32> -> vector<8x128xf32>
    %c0_16 = arith.constant 0 : index
    %c0_17 = arith.constant 0 : index
    %14 = vector.load %arg5[%c0_16, %c0_17] : memref<1x128xf32, #tpu.memory_space<vmem>>, vector<1x128xf32>
    %15 = vector.broadcast %14 : vector<1x128xf32> to vector<8x128xf32>
    %16 = arith.addf %13, %15 : vector<8x128xf32>
    %cst_18 = arith.constant 0.000000e+00 : f32
    %17 = vector.broadcast %cst_18 : f32 to vector<8x128xf32>
    %18 = arith.maximumf %16, %17 : vector<8x128xf32>
    %c0_19 = arith.constant 0 : index
    %c0_20 = arith.constant 0 : index
    %19 = vector.load %arg6[%c0_19, %c0_20] : memref<1x128xf32, #tpu.memory_space<vmem>>, vector<1x128xf32>
    %20 = vector.broadcast %19 : vector<1x128xf32> to vector<8x128xf32>
    %21 = arith.mulf %18, %20 : vector<8x128xf32>
    %cst_21 = arith.constant dense<0.000000e+00> : vector<8xf32>
    %22 = vector.multi_reduction <add>, %21, %cst_21 [1] : vector<8x128xf32> to vector<8xf32>
    %23 = vector.shape_cast %22 : vector<8xf32> to vector<8x1xf32>
    %c0_22 = arith.constant 0 : index
    %c0_23 = arith.constant 0 : index
    %24 = vector.load %arg7[%c0_22, %c0_23] : memref<1x1xf32, #tpu.memory_space<vmem>>, vector<1x1xf32>
    %25 = vector.broadcast %24 : vector<1x1xf32> to vector<8x1xf32>
    %26 = arith.addf %23, %25 : vector<8x1xf32>
    %27 = arith.negf %26 : vector<8x1xf32>
    %28 = math.exp %27 : vector<8x1xf32>
    %cst_24 = arith.constant 1.000000e+00 : f32
    %29 = vector.broadcast %cst_24 : f32 to vector<8x1xf32>
    %30 = arith.addf %29, %28 : vector<8x1xf32>
    %31 = arith.divf %29, %30 : vector<8x1xf32>
    %c0_25 = arith.constant 0 : index
    %c0_26 = arith.constant 0 : index
    %32 = vector.load %arg8[%c0_25, %c0_26] : memref<8x1xf32, #tpu.memory_space<vmem>>, vector<8x1xf32>
    tpu.vector_store %arg8[%c0_25, %c0_26], %31 {strides = array<i32>} : memref<8x1xf32, #tpu.memory_space<vmem>>, vector<8x1xf32>,
    return
  }
  func.func @transform_0(%arg0: i32) -> (i32, i32) {
    %c0_i32 = arith.constant 0 : i32
    %c0_i32_0 = arith.constant 0 : i32
    return %arg0, %c0_i32 : i32, i32
  }
  func.func @transform_1(%arg0: i32) -> (i32, i32) {
    %c0_i32 = arith.constant 0 : i32
    %c0_i32_0 = arith.constant 0 : i32
    %c0_i32_1 = arith.constant 0 : i32
    return %c0_i32, %c0_i32_0 : i32, i32
  }
  func.func @transform_2(%arg0: i32) -> (i32, i32) {
    %c0_i32 = arith.constant 0 : i32
    %c0_i32_0 = arith.constant 0 : i32
    %c0_i32_1 = arith.constant 0 : i32
    return %c0_i32, %c0_i32_0 : i32, i32
  }
  func.func @transform_3(%arg0: i32) -> (i32, i32) {
    %c0_i32 = arith.constant 0 : i32
    %c0_i32_0 = arith.constant 0 : i32
    %c0_i32_1 = arith.constant 0 : i32
    return %c0_i32, %c0_i32_0 : i32, i32
  }
  func.func @transform_4(%arg0: i32) -> (i32, i32) {
    %c0_i32 = arith.constant 0 : i32
    %c0_i32_0 = arith.constant 0 : i32
    %c0_i32_1 = arith.constant 0 : i32
    return %c0_i32, %c0_i32_0 : i32, i32
  }
  func.func @transform_5(%arg0: i32) -> (i32, i32) {
    %c0_i32 = arith.constant 0 : i32
    %c0_i32_0 = arith.constant 0 : i32
    %c0_i32_1 = arith.constant 0 : i32
    return %c0_i32, %c0_i32_0 : i32, i32
  }
  func.func @transform_6(%arg0: i32) -> (i32, i32) {
    %c0_i32 = arith.constant 0 : i32
    %c0_i32_0 = arith.constant 0 : i32
    %c0_i32_1 = arith.constant 0 : i32
    return %c0_i32, %c0_i32_0 : i32, i32
  }
  func.func @transform_7(%arg0: i32) -> (i32, i32) {
    %c0_i32 = arith.constant 0 : i32
    %c0_i32_0 = arith.constant 0 : i32
    return %arg0, %c0_i32 : i32, i32
  }
}

</mosaic_0001>

<llo_original>
// kernel: tpu_custom_call.1
$region0: #{tpu_custom_call.1}
  #allocation0 [shape = 'u32[]', space=smem, size = 0x4, offset = 0x4, fixed_abs, tag = 'smem constant byte address 0x4 - core index']
  #allocation1 [shape = 'u32[72,128]{1,0:T(1,128)}', space=vmem, size = 0x9000, scoped, tag = 'internal scratch']
  #allocation2 [shape = 'f32[8,128]{1,0:T(8,128)}', space=vmem, size = 0x1000, scoped, tag = 'scratch operand']
  #allocation3 [shape = 'f32[1,1]{1,0:T(1,128)S(1)}', space=vmem, size = 0x200, scoped, tag = 'scoped memory for tpu_custom_call.1']
  %s0 = inlined_call_operand.hbm [shape: f32[8,65], index: 0, kind: input, shape index: {}]
  %s1 = inlined_call_operand.hbm [shape: f32[128,256], index: 1, kind: input, shape index: {}]
  %s2 = inlined_call_operand.vmem [shape: f32[1,256], index: 2, kind: input, shape index: {}]
  %s3 = inlined_call_operand.hbm [shape: f32[256,128], index: 3, kind: input, shape index: {}]
  %s4 = inlined_call_operand.vmem [shape: f32[1,128], index: 4, kind: input, shape index: {}]
  %s5 = inlined_call_operand.vmem [shape: f32[1,128], index: 5, kind: input, shape index: {}]
  %s6 = inlined_call_operand.<no memory space> [shape: f32[1,1], index: 6, kind: input, shape index: {}]
  %s7 = inlined_call_operand.vmem [shape: f32[8,1], index: 7, kind: output, shape index: {}]
  %s8 = sld [smem:[#allocation0]]
  $region50: #{tpu_custom_call.1} parent=0
    _
  %s10 = ssub.s32 1, %s8
  %s11 = scalar_select 0, %s10, %s8
  %v12 = vstv %s6
  %13 = vst [vmem:[#allocation3] sm:$0x1] %v12
  $region1: #{tpu_custom_call.1} parent=0
    #allocation4 [shape = 'u8[4096]{0}', space=vmem, size = 0x1000, scoped, tag = 'input window, operand 0, single buffered']
    #allocation5 [shape = 's32[1]{0}', space=sflag, size = 0x4, scoped, tag = 'scoped memory for tpu_custom_call.1']
    #allocation6 [shape = 'u8[131072]{0}', space=vmem, size = 0x20000, scoped, tag = 'input window, operand 1, single buffered']
    #allocation7 [shape = 's32[1]{0}', space=sflag, size = 0x4, scoped, tag = 'scoped memory for tpu_custom_call.1']
    #allocation8 [shape = 'u8[131072]{0}', space=vmem, size = 0x20000, scoped, tag = 'input window, operand 3, single buffered']
    %14 = vsyncpa [#allocation5], 0
    %15 = vsyncpa [#allocation7], 0
    // Predicated region
    $region2: #{tpu_custom_call.1} parent=1 // pred_check
      _
    $region3: #{tpu_custom_call.1} parent=1 // pred_check_branch
      %17 = sbr.rel (0) target = $region5
    $region4: #{tpu_custom_call.1} parent=1 // pred_region
      %19 = vsyncadd [#allocation5], 0
      %s21 = sshll.u32 %s0, 4
      %s22 = int_to_ptr.hbm [resolvable:$true] %s21
      %s23 = sshll.u32 [#allocation4], 4
      %s24 = int_to_ptr.vmem [resolvable:$true] %s23
      %26 = dma.hbm_to_vmem [thread:$0]  %s22, 128, %s24, [#allocation5]
    $region5: #{tpu_custom_call.1} parent=1 // pred_fallthru
      _
    // Predicated region
    $region6: #{tpu_custom_call.1} parent=1 // pred_check
      _
    $region7: #{tpu_custom_call.1} parent=1 // pred_check_branch
      %28 = sbr.rel (0) target = $region9
    $region8: #{tpu_custom_call.1} parent=1 // pred_region
      %30 = vsyncadd [#allocation7], 0
      %s31 = sshll.u32 %s1, 4
      %s32 = int_to_ptr.hbm [resolvable:$true] %s31
      %s33 = sshll.u32 [#allocation6], 4
      %s34 = int_to_ptr.vmem [resolvable:$true] %s33
      %39 = dma.hbm_to_vmem [thread:$0]  %s32, 4096, %s34, [#allocation7], 256, 256, 16
    $region9: #{tpu_custom_call.1} parent=1 // pred_fallthru
      _
    // Predicated region
    $region10: #{tpu_custom_call.1} parent=1 // pred_check
      _
    $region11: #{tpu_custom_call.1} parent=1 // pred_check_branch
      %41 = sbr.rel (0) target = $region13
    $region12: #{tpu_custom_call.1} parent=1 // pred_region
      _
    $region13: #{tpu_custom_call.1} parent=1 // pred_fallthru
      _
    // Predicated region
    $region14: #{tpu_custom_call.1} parent=1 // pred_check
      _
    $region15: #{tpu_custom_call.1} parent=1 // pred_check_branch
      %43 = sbr.rel (0) target = $region17
    $region16: #{tpu_custom_call.1} parent=1 // pred_region
      %45 = vsyncadd [#allocation7], 0
      %s46 = sshll.u32 %s3, 4
      %s47 = int_to_ptr.hbm [resolvable:$true] %s46
      %s48 = sshll.u32 [#allocation8], 4
      %s49 = int_to_ptr.vmem [resolvable:$true] %s48
      %54 = dma.hbm_to_vmem [thread:$0]  %s47, 4096, %s49, [#allocation7], 128, 128, 8
    $region17: #{tpu_custom_call.1} parent=1 // pred_fallthru
      _
    // Predicated region
    $region18: #{tpu_custom_call.1} parent=1 // pred_check
      _
    $region19: #{tpu_custom_call.1} parent=1 // pred_check_branch
      %56 = sbr.rel (0) target = $region21
    $region20: #{tpu_custom_call.1} parent=1 // pred_region
      _
    $region21: #{tpu_custom_call.1} parent=1 // pred_fallthru
      _
    // Predicated region
    $region22: #{tpu_custom_call.1} parent=1 // pred_check
      _
    $region23: #{tpu_custom_call.1} parent=1 // pred_check_branch
      %58 = sbr.rel (0) target = $region25
    $region24: #{tpu_custom_call.1} parent=1 // pred_region
      _
    $region25: #{tpu_custom_call.1} parent=1 // pred_fallthru
      _
    // Predicated region
    $region26: #{tpu_custom_call.1} parent=1 // pred_check
      _
    $region27: #{tpu_custom_call.1} parent=1 // pred_check_branch
      %60 = sbr.rel (0) target = $region29
    $region28: #{tpu_custom_call.1} parent=1 // pred_region
      _
    $region29: #{tpu_custom_call.1} parent=1 // pred_fallthru
      _
    // Predicated region
    $region30: #{tpu_custom_call.1} parent=1 // pred_check
      _
    $region31: #{tpu_custom_call.1} parent=1 // pred_check_branch
      %62 = sbr.rel (0) target = $region33
    $region32: #{tpu_custom_call.1} parent=1 // pred_region
      %64 = dma.done [#allocation5], 128
    $region33: #{tpu_custom_call.1} parent=1 // pred_fallthru
      _
    // Predicated region
    $region34: #{tpu_custom_call.1} parent=1 // pred_check
      _
    $region35: #{tpu_custom_call.1} parent=1 // pred_check_branch
      %66 = sbr.rel (0) target = $region37
    $region36: #{tpu_custom_call.1} parent=1 // pred_region
      %68 = dma.done [#allocation7], 4096
    $region37: #{tpu_custom_call.1} parent=1 // pred_fallthru
      _
    // Predicated region
    $region38: #{tpu_custom_call.1} parent=1 // pred_check
      _
    $region39: #{tpu_custom_call.1} parent=1 // pred_check_branch
      %70 = sbr.rel (0) target = $region41
    $region40: #{tpu_custom_call.1} parent=1 // pred_region
      %72 = dma.done [#allocation7], 4096
    $region41: #{tpu_custom_call.1} parent=1 // pred_fallthru
      _
    %73 = vst [vmem:[#allocation2] sm:$0xff] 0.0
    %v74 = vld [vmem:[#allocation4] sm:$0xff]
    %vm75 = vcmask 531456
    %76 = vst.msk [vmem:[#allocation2] sm:$0xff] %vm75, %v74
    %v77 = vld [vmem:[#allocation2] sm:$0xff]
    %v78 = vld [vmem:[#allocation6] sm:$0xff]
    %v79 = vld [vmem:[#allocation6 + $0x8] sm:$0xff]
    %v80 = vld [vmem:[#allocation6 + $0x10] sm:$0xff]
    %v81 = vld [vmem:[#allocation6 + $0x18] sm:$0xff]
    %v82 = vld [vmem:[#allocation6 + $0x20] sm:$0xff]
    %v83 = vld [vmem:[#allocation6 + $0x28] sm:$0xff]
    %v84 = vld [vmem:[#allocation6 + $0x30] sm:$0xff]
    %v85 = vld [vmem:[#allocation6 + $0x38] sm:$0xff]
    %v86 = vld [vmem:[#allocation6 + $0x40] sm:$0xff]
    %v87 = vld [vmem:[#allocation6 + $0x48] sm:$0xff]
    %v88 = vld [vmem:[#allocation6 + $0x50] sm:$0xff]
    %v89 = vld [vmem:[#allocation6 + $0x58] sm:$0xff]
    %v90 = vld [vmem:[#allocation6 + $0x60] sm:$0xff]
    %v91 = vld [vmem:[#allocation6 + $0x68] sm:$0xff]
    %v92 = vld [vmem:[#allocation6 + $0x70] sm:$0xff]
    %v93 = vld [vmem:[#allocation6 + $0x78] sm:$0xff]
    %v94 = vld [vmem:[#allocation6 + $0x80] sm:$0xff]
    %v95 = vld [vmem:[#allocation6 + $0x88] sm:$0xff]
    %v96 = vld [vmem:[#allocation6 + $0x90] sm:$0xff]
    %v97 = vld [vmem:[#allocation6 + $0x98] sm:$0xff]
    %v98 = vld [vmem:[#allocation6 + $0xa0] sm:$0xff]
    %v99 = vld [vmem:[#allocation6 + $0xa8] sm:$0xff]
    %v100 = vld [vmem:[#allocation6 + $0xb0] sm:$0xff]
    %v101 = vld [vmem:[#allocation6 + $0xb8] sm:$0xff]
    %v102 = vld [vmem:[#allocation6 + $0xc0] sm:$0xff]
    %v103 = vld [vmem:[#allocation6 + $0xc8] sm:$0xff]
    %v104 = vld [vmem:[#allocation6 + $0xd0] sm:$0xff]
    %v105 = vld [vmem:[#allocation6 + $0xd8] sm:$0xff]
    %v106 = vld [vmem:[#allocation6 + $0xe0] sm:$0xff]
    %v107 = vld [vmem:[#allocation6 + $0xe8] sm:$0xff]
    %v108 = vld [vmem:[#allocation6 + $0xf0] sm:$0xff]
    %v109 = vld [vmem:[#allocation6 + $0xf8] sm:$0xff]
    %v110 = vld [vmem:[%s2] sm:$0x3]
    %v112 = vperm.slane %v110, 0
    %v113 = vperm.slane %v110, 1
    %116 = vmatpush.msra.mxu0 %v108
    %117 = vmatpush.msra.mxu0 %v106
    %118 = vmatpush.msra.mxu0 %v104
    %119 = vmatpush.msra.mxu0 %v102
    %120 = vmatpush.msra.mxu0 %v100
    %121 = vmatpush.msra.mxu0 %v98
    %122 = vmatpush.msra.mxu0 %v96
    %123 = vmatpush.msra.mxu0 %v94
    %124 = vmatpush.msra.mxu0 %v92
    %125 = vmatpush.msra.mxu0 %v90
    %126 = vmatpush.msra.mxu0 %v88
    %127 = vmatpush.msra.mxu0 %v86
    %128 = vmatpush.msra.mxu0 %v84
    %129 = vmatpush.msra.mxu0 %v82
    %130 = vmatpush.msra.mxu0 %v80
    %131 = vmatpush.msra.mxu0 %v78
    %132 = vmatmul.f32.gmra.mxu0 %v77
    %v133 = vpop.f32.mrf.mxu0
    %v134 = vadd.f32 %v112, %v133
    %135 = vdwg.mxu0
    %136 = vmatpush.msra.mxu0 %v109
    %137 = vmatpush.msra.mxu0 %v107
    %138 = vmatpush.msra.mxu0 %v105
    %139 = vmatpush.msra.mxu0 %v103
    %140 = vmatpush.msra.mxu0 %v101
    %141 = vmatpush.msra.mxu0 %v99
    %142 = vmatpush.msra.mxu0 %v97
    %143 = vmatpush.msra.mxu0 %v95
    %144 = vmatpush.msra.mxu0 %v93
    %145 = vmatpush.msra.mxu0 %v91
    %146 = vmatpush.msra.mxu0 %v89
    %147 = vmatpush.msra.mxu0 %v87
    %148 = vmatpush.msra.mxu0 %v85
    %149 = vmatpush.msra.mxu0 %v83
    %150 = vmatpush.msra.mxu0 %v81
    %151 = vmatpush.msra.mxu0 %v79
    %152 = vmatmul.f32.gmra.mxu0 %v77
    %v153 = vpop.f32.mrf.mxu0
    %v154 = vadd.f32 %v113, %v153
    %155 = vdwg.mxu0
    %v156 = vmax.f32 %v134, 0.0
    %v157 = vmax.f32 %v154, 0.0
    %v158 = vld [vmem:[#allocation8] sm:$0xff]
    %v159 = vld [vmem:[#allocation8 + $0x8] sm:$0xff]
    %v160 = vld [vmem:[#allocation8 + $0x10] sm:$0xff]
    %v161 = vld [vmem:[#allocation8 + $0x18] sm:$0xff]
    %v162 = vld [vmem:[#allocation8 + $0x20] sm:$0xff]
    %v163 = vld [vmem:[#allocation8 + $0x28] sm:$0xff]
    %v164 = vld [vmem:[#allocation8 + $0x30] sm:$0xff]
    %v165 = vld [vmem:[#allocation8 + $0x38] sm:$0xff]
    %v166 = vld [vmem:[#allocation8 + $0x40] sm:$0xff]
    %v167 = vld [vmem:[#allocation8 + $0x48] sm:$0xff]
    %v168 = vld [vmem:[#allocation8 + $0x50] sm:$0xff]
    %v169 = vld [vmem:[#allocation8 + $0x58] sm:$0xff]
    %v170 = vld [vmem:[#allocation8 + $0x60] sm:$0xff]
    %v171 = vld [vmem:[#allocation8 + $0x68] sm:$0xff]
    %v172 = vld [vmem:[#allocation8 + $0x70] sm:$0xff]
    %v173 = vld [vmem:[#allocation8 + $0x78] sm:$0xff]
    %v174 = vld [vmem:[#allocation8 + $0x80] sm:$0xff]
    %v175 = vld [vmem:[#allocation8 + $0x88] sm:$0xff]
    %v176 = vld [vmem:[#allocation8 + $0x90] sm:$0xff]
    %v177 = vld [vmem:[#allocation8 + $0x98] sm:$0xff]
    %v178 = vld [vmem:[#allocation8 + $0xa0] sm:$0xff]
    %v179 = vld [vmem:[#allocation8 + $0xa8] sm:$0xff]
    %v180 = vld [vmem:[#allocation8 + $0xb0] sm:$0xff]
    %v181 = vld [vmem:[#allocation8 + $0xb8] sm:$0xff]
    %v182 = vld [vmem:[#allocation8 + $0xc0] sm:$0xff]
    %v183 = vld [vmem:[#allocation8 + $0xc8] sm:$0xff]
    %v184 = vld [vmem:[#allocation8 + $0xd0] sm:$0xff]
    %v185 = vld [vmem:[#allocation8 + $0xd8] sm:$0xff]
    %v186 = vld [vmem:[#allocation8 + $0xe0] sm:$0xff]
    %v187 = vld [vmem:[#allocation8 + $0xe8] sm:$0xff]
    %v188 = vld [vmem:[#allocation8 + $0xf0] sm:$0xff]
    %v189 = vld [vmem:[#allocation8 + $0xf8] sm:$0xff]
    %v190 = vld [vmem:[%s4] sm:$0x1]
    %v192 = vperm.slane %v190, 0
    %194 = vmatpush.msra.mxu0 %v173
    %195 = vmatpush.msra.mxu0 %v172
    %196 = vmatpush.msra.mxu0 %v171
    %197 = vmatpush.msra.mxu0 %v170
    %198 = vmatpush.msra.mxu0 %v169
    %199 = vmatpush.msra.mxu0 %v168
    %200 = vmatpush.msra.mxu0 %v167
    %201 = vmatpush.msra.mxu0 %v166
    %202 = vmatpush.msra.mxu0 %v165
    %203 = vmatpush.msra.mxu0 %v164
    %204 = vmatpush.msra.mxu0 %v163
    %205 = vmatpush.msra.mxu0 %v162
    %206 = vmatpush.msra.mxu0 %v161
    %207 = vmatpush.msra.mxu0 %v160
    %208 = vmatpush.msra.mxu0 %v159
    %209 = vmatpush.msra.mxu0 %v158
    %210 = vmatmul.f32.gmra.mxu0 %v156
    %v211 = vpop.f32.mrf.mxu0
    %v212 = vadd.f32 %v192, %v211
    %213 = vdwg.mxu0
    %214 = vmatpush.msra.mxu0 %v189
    %215 = vmatpush.msra.mxu0 %v188
    %216 = vmatpush.msra.mxu0 %v187
    %217 = vmatpush.msra.mxu0 %v186
    %218 = vmatpush.msra.mxu0 %v185
    %219 = vmatpush.msra.mxu0 %v184
    %220 = vmatpush.msra.mxu0 %v183
    %221 = vmatpush.msra.mxu0 %v182
    %222 = vmatpush.msra.mxu0 %v181
    %223 = vmatpush.msra.mxu0 %v180
    %224 = vmatpush.msra.mxu0 %v179
    %225 = vmatpush.msra.mxu0 %v178
    %226 = vmatpush.msra.mxu0 %v177
    %227 = vmatpush.msra.mxu0 %v176
    %228 = vmatpush.msra.mxu0 %v175
    %229 = vmatpush.msra.mxu0 %v174
    %230 = vmatmul.f32.gmra.mxu0 %v157
    %v231 = vpop.f32.mrf.mxu0
    %v232 = vadd.f32 %v212, %v231
    %233 = vdwg.mxu0
    %v234 = vmax.f32 %v232, 0.0
    %v235 = vld [vmem:[%s5] sm:$0x1]
    %v237 = vperm.slane %v235, 0
    %v239 = vmul.f32 %v234, %v237
    %240 = vadd.xlane.f32.xlu0 %v239
    %v241 = vpop.xlane.xlu0 %240
    %v242 = vld [vmem:[#allocation3] sm:$0x1]
    %v244 = vperm.slane %v242, 0
    %v246 = vadd.f32 %v241, %v244
    %v247 = vxor.u32 %v246, 2147483648
    %v248 = vmul.f32 %v247, 1.442695
    %v249 = vpow.pop %v248
    %v250 = vadd.f32 %v249, 1.0
    %v251 = vrcp.pop %v250
    %v252 = vmul.f32 %v250, %v251
    %v253 = vsub.f32 1.0, %v252
    %v254 = vmul.f32 %v251, %v253
    %v255 = vadd.f32 %v251, %v254
    %vm256 = vweird.f32 %v250
    %vm257 = vweird.f32 %v251
    %vm258 = vmor %vm256, %vm257
    %v259 = vsel %vm258, %v251, %v255
    %v260 = vand.u32 2147483647, %v250
    %vm261 = vcmp.eq.f32.partialorder %v260, 8.507059e+37
    %v262 = vand.u32 %v250, 2147483648
    %v263 = vor.u32 1.1754944e-38, %v262
    %v264 = vsel %vm261, %v263, %v259
    %v265 = vmul.f32 1.0, %v264
    %vm266 = vcmask 7168
    %267 = vst.msk [vmem:[%s7] sm:$0xff] %vm266, %v265
    // Predicated region
    $region42: #{tpu_custom_call.1} parent=1 // pred_check
      _
    $region43: #{tpu_custom_call.1} parent=1 // pred_check_branch
      %269 = sbr.rel (0) target = $region45
    $region44: #{tpu_custom_call.1} parent=1 // pred_region
      _
    $region45: #{tpu_custom_call.1} parent=1 // pred_fallthru
      _
    // Predicated region
    $region46: #{tpu_custom_call.1} parent=1 // pred_check
      _
    $region47: #{tpu_custom_call.1} parent=1 // pred_check_branch
      %271 = sbr.rel (0) target = $region49
    $region48: #{tpu_custom_call.1} parent=1 // pred_region
      _
    $region49: #{tpu_custom_call.1} parent=1 // pred_fallthru
      _
    %272 = vsyncpa [#allocation5], 1
    %273 = vsyncpa [#allocation7], 1

</llo_original>
